<compile_context>
chip_gen: v6e
topology: v6e:2x2x1
jax: 0.10.0
libtpu: 0.0.40
codegen_flags: <defaults>
</compile_context>

<pallas_src>
import jax
import jax.numpy as jnp
from jax import lax
from jax.experimental import pallas as pl
from jax.experimental.pallas import tpu as pltpu


def _round_up(x, m):
    return (x + m - 1) // m * m


# ---------------- tile-size helpers ----------------

def _pick_m_tile(m, max_tile=512):
    """Row tile for the im2col matmul: multiple of 8, exact divisor of the
    8-rounded M (no whole-tensor re-pad), >=2 grid steps when M allows so a
    v7x part can use both TensorCores."""
    m8 = _round_up(m, 8)
    tm = min(max_tile, m8)
    if m8 // tm < 2 and m8 >= 16:
        tm = _round_up(m8 // 2, 8)
    for cand in range(tm, 7, -8):
        if m8 % cand == 0:
            tm = cand
            break
    return tm, m8


def _pick_row_tile(ho, wo, n, target=1024):
    """Output-row tile for the fused conv kernel: divisor of Ho, bounded MXU
    M-dim (th*wo), and >=2 row tiles when N == 1 (v7x megacore)."""
    best = 1
    for th in range(1, ho + 1):
        if ho % th != 0 or th * wo > target:
            continue
        if n == 1 and th == ho and ho > 1:
            continue
        best = th
    return best


def _pick_n_tile(cout_p, target=512):
    """Cout tile (multiple of 128, divides cout_p) bounding the resident
    weight block (matters for v7x's 64 MiB VMEM at large channel counts)."""
    if cout_p <= target:
        return cout_p
    tn = target
    while cout_p % tn:
        tn -= 128
    return tn


def _fold_bn(gamma, beta, mean, var, eps):
    scale = gamma / jnp.sqrt(var + eps)
    shift = (beta - mean * scale).astype(jnp.float32)
    return scale, shift


# ---------------- kernels ----------------

def _matmul_shift_relu_kernel(p_ref, w_ref, shift_ref, o_ref):
    # (tm, Kp) @ (Kp, Cout_p) on the MXU, f32 accumulation; BN scale already in W.
    acc = jnp.dot(p_ref[...], w_ref[...], preferred_element_type=jnp.float32)
    o_ref[...] = jnp.maximum(acc + shift_ref[...], 0.0).astype(o_ref.dtype)


def _fused_conv3x3_s1_kernel(x_ref, w_ref, shift_ref, o_ref):
    # x_ref:     (Hp, Wp, Cp)  spatially padded image, resident across row/cout tiles
    # w_ref:     (9, Cp, tn)   per-tap weights, BN scale folded in, bf16
    # shift_ref: (1, tn)       folded BN shift, f32
    # o_ref:     (th, Wo, tn)  bf16, lane-dense (tn multiple of 128)
    th, wo, tn = o_ref.shape
    cp = x_ref.shape[-1]
    i = pl.program_id(2)                              # row-tile index
    row0 = pl.multiple_of(i * th, th)
    acc = jnp.zeros((th * wo, tn), jnp.float32)
    for ky in range(3):
        rows = x_ref[pl.ds(row0 + ky, th)]            # (th, Wp, Cp)
        for kx in range(3):
            tap = rows[:, kx:kx + wo, :].reshape(th * wo, cp)
            acc = acc + jnp.dot(tap, w_ref[3 * ky + kx],
                                preferred_element_type=jnp.float32)
    y = jnp.maximum(acc + shift_ref[...], 0.0)
    o_ref[...] = y.reshape(th, wo, tn).astype(o_ref.dtype)


# ---------------- layer wrappers ----------------

def conv3x3_s2_bn_relu_im2col(x_nhwc, w_oihw, gamma, beta, mean, var, eps=1e-5):
    """Stride-2 3x3 conv + folded BN + ReLU as one im2col MXU matmul.
    Output keeps Cout padded to a multiple of 128 and is bf16."""
    # TODO(synk): fuse this im2col too (halo'd row-slab manual DMA) for large Cin;
    # for the small Cin of the downscale conv the patches tensor is cheap.
    N, H, W, Cin = x_nhwc.shape
    Cout = w_oihw.shape[0]
    stride = 2
    Ho = (H + 2 - 3) // stride + 1
    Wo = (W + 2 - 3) // stride + 1
    M = N * Ho * Wo
    K = 9 * Cin
    Kp = _round_up(K, 128)
    Cout_p = _round_up(Cout, 128)

    scale, shift = _fold_bn(gamma, beta, mean, var, eps)
    w_k = jnp.transpose(w_oihw, (2, 3, 1, 0)).reshape(K, Cout) * scale[None, :]
    w_k = jnp.pad(w_k, ((0, Kp - K), (0, Cout_p - Cout))).astype(jnp.bfloat16)
    shift_p = jnp.pad(shift, (0, Cout_p - Cout)).reshape(1, Cout_p)

    xp = jnp.pad(x_nhwc, ((0, 0), (1, 1), (1, 1), (0, 0)))
    taps = [xp[:, ky:ky + (Ho - 1) * stride + 1:stride,
               kx:kx + (Wo - 1) * stride + 1:stride, :]
            for ky in range(3) for kx in range(3)]
    patches = jnp.concatenate(taps, axis=-1).reshape(M, K).astype(jnp.bfloat16)

    tm, m_pad = _pick_m_tile(M)
    if m_pad != M or Kp != K:
        patches = jnp.pad(patches, ((0, m_pad - M), (0, Kp - K)))

    out = pl.pallas_call(
        _matmul_shift_relu_kernel,
        out_shape=jax.ShapeDtypeStruct((m_pad, Cout_p), jnp.bfloat16),
        grid_spec=pltpu.PrefetchScalarGridSpec(
            num_scalar_prefetch=0,
            grid=(m_pad // tm,),
            in_specs=[
                pl.BlockSpec((tm, Kp), lambda i: (i, 0)),
                pl.BlockSpec((Kp, Cout_p), lambda i: (0, 0)),
                pl.BlockSpec((1, Cout_p), lambda i: (0, 0)),
            ],
            out_specs=pl.BlockSpec((tm, Cout_p), lambda i: (i, 0)),
        ),
        compiler_params=pltpu.CompilerParams(
            dimension_semantics=("parallel",),
            vmem_limit_bytes=32 * 1024 * 1024),
    )(patches, w_k, shift_p)

    return out[:M].reshape(N, Ho, Wo, Cout_p)


def conv3x3_s1_bn_relu_fused(x_nhwc, w_oihw, gamma, beta, mean, var, eps=1e-5):
    """Stride-1 3x3 conv + folded BN + ReLU with the im2col fused in-kernel.
    Input may carry (zero) channel padding; output keeps Cout padded to a
    multiple of 128 and is bf16."""
    N, H, W, C = x_nhwc.shape
    Cout, Cin = w_oihw.shape[0], w_oihw.shape[1]
    Cp = _round_up(max(C, Cin), 128)
    Cout_p = _round_up(Cout, 128)

    if C != Cp:
        x_nhwc = jnp.pad(x_nhwc, ((0, 0), (0, 0), (0, 0), (0, Cp - C)))
    xp = jnp.pad(x_nhwc.astype(jnp.bfloat16), ((0, 0), (1, 1), (1, 1), (0, 0)))
    Hp, Wp = H + 2, W + 2
    Ho, Wo = H, W

    scale, shift = _fold_bn(gamma, beta, mean, var, eps)
    w9 = jnp.transpose(w_oihw, (2, 3, 1, 0)).reshape(9, Cin, Cout) * scale[None, None, :]
    w9 = jnp.pad(w9, ((0, 0), (0, Cp - Cin), (0, Cout_p - Cout))).astype(jnp.bfloat16)
    shift_p = jnp.pad(shift, (0, Cout_p - Cout)).reshape(1, Cout_p)

    th = _pick_row_tile(Ho, Wo, N)
    tn = _pick_n_tile(Cout_p)
    grid = (N, Cout_p // tn, Ho // th)

    out = pl.pallas_call(
        _fused_conv3x3_s1_kernel,
        out_shape=jax.ShapeDtypeStruct((N, Ho, Wo, Cout_p), jnp.bfloat16),
        grid_spec=pltpu.PrefetchScalarGridSpec(
            num_scalar_prefetch=0,
            grid=grid,
            in_specs=[
                # Whole padded image per n; index constant over (cout, row) tiles
                # so the block stays VMEM-resident instead of being re-DMA'd.
                pl.BlockSpec((None, Hp, Wp, Cp), lambda n, j, i: (n, 0, 0, 0)),
                pl.BlockSpec((9, Cp, tn), lambda n, j, i: (0, 0, j)),
                pl.BlockSpec((1, tn), lambda n, j, i: (0, j)),
            ],
            out_specs=pl.BlockSpec((None, th, Wo, tn), lambda n, j, i: (n, i, 0, j)),
        ),
        compiler_params=pltpu.CompilerParams(
            dimension_semantics=("parallel", "parallel", "parallel"),
            vmem_limit_bytes=32 * 1024 * 1024),
    )(xp, w9, shift_p)
    return out


# ---------------- DownBlock forward ----------------

def init_down_block_params(key, in_ch, out_ch):
    """Deterministic synthetic params matching DownBlock's __init__ shapes."""
    ks = jax.random.split(key, 12)
    params = {}
    params["w0"] = 0.1 * jax.random.normal(ks[0], (out_ch, in_ch, 3, 3), jnp.float32)
    params["g0"] = 1.0 + 0.1 * jax.random.normal(ks[1], (out_ch,), jnp.float32)
    params["b0"] = 0.1 * jax.random.normal(ks[2], (out_ch,), jnp.float32)
    params["m0"] = 0.1 * jax.random.normal(ks[3], (out_ch,), jnp.float32)
    params["v0"] = jnp.abs(jax.random.normal(ks[4], (out_ch,), jnp.float32)) + 0.5
    params["w1"] = 0.1 * jax.random.normal(ks[5], (out_ch, out_ch, 3, 3), jnp.float32)
    params["g1"] = 1.0 + 0.1 * jax.random.normal(ks[6], (out_ch,), jnp.float32)
    params["b1"] = 0.1 * jax.random.normal(ks[7], (out_ch,), jnp.float32)
    params["m1"] = 0.1 * jax.random.normal(ks[8], (out_ch,), jnp.float32)
    params["v1"] = jnp.abs(jax.random.normal(ks[9], (out_ch,), jnp.float32)) + 0.5
    params["w2"] = 0.1 * jax.random.normal(ks[10], (out_ch, out_ch, 3, 3), jnp.float32)
    params["g2"] = 1.0 + 0.1 * jax.random.normal(ks[11], (out_ch,), jnp.float32)
    params["b2"] = jnp.zeros((out_ch,), jnp.float32)
    params["m2"] = jnp.zeros((out_ch,), jnp.float32)
    params["v2"] = jnp.ones((out_ch,), jnp.float32)
    return params


def down_block_forward(x_nchw, p):
    """DownBlock forward (inference-mode BN). PyTorch NCHW in/out, f32 out."""
    out_ch = p["w0"].shape[0]
    x = jnp.transpose(x_nchw, (0, 2, 3, 1))                       # NCHW -> NHWC
    # Downscale conv (stride 2) + BN + ReLU — small im2col matmul kernel.
    x = conv3x3_s2_bn_relu_im2col(x, p["w0"], p["g0"], p["b0"], p["m0"], p["v0"])
    # CvBlock: (Conv => BN => ReLU) x 2, stride 1 — fused im2col kernels.
    # Channel padding / bf16 activations are carried through the chain.
    x = conv3x3_s1_bn_relu_fused(x, p["w1"], p["g1"], p["b1"], p["m1"], p["v1"])
    x = conv3x3_s1_bn_relu_fused(x, p["w2"], p["g2"], p["b2"], p["m2"], p["v2"])
    x = x[..., :out_ch].astype(jnp.float32)                       # drop padding once
    return jnp.transpose(x, (0, 3, 1, 2))                         # NHWC -> NCHW


# ---------------- pure-JAX reference (f32) ----------------

def _ref_conv_bn_relu(x_nhwc, w_oihw, gamma, beta, mean, var, stride, eps=1e-5):
    w_hwio = jnp.transpose(w_oihw, (2, 3, 1, 0))
    y = lax.conv_general_dilated(
        x_nhwc, w_hwio, window_strides=(stride, stride),
        padding=((1, 1), (1, 1)),
        dimension_numbers=("NHWC", "HWIO", "NHWC"))
    scale = gamma / jnp.sqrt(var + eps)
    y = y * scale + (beta - mean * scale)
    return jnp.maximum(y, 0.0)


def _ref_down_block(x_nchw, p):
    x = jnp.transpose(x_nchw, (0, 2, 3, 1))
    x = _ref_conv_bn_relu(x, p["w0"], p["g0"], p["b0"], p["m0"], p["v0"], 2)
    x = _ref_conv_bn_relu(x, p["w1"], p["g1"], p["b1"], p["m1"], p["v1"], 1)
    x = _ref_conv_bn_relu(x, p["w2"], p["g2"], p["b2"], p["m2"], p["v2"], 1)
    return jnp.transpose(x, (0, 3, 1, 2))


if __name__ == "__main__":
    key = jax.random.PRNGKey(0)
    k_x, k_p = jax.random.split(key)

    N, in_ch, out_ch, H, W = 2, 4, 8, 16, 16
    x = jax.random.normal(k_x, (N, in_ch, H, W), jnp.float32)  # NCHW like PyTorch
    params = init_down_block_params(k_p, in_ch, out_ch)

    y = down_block_forward(x, params)
    jax.block_until_ready(y)
    assert y.shape == (N, out_ch, H // 2, W // 2), y.shape

    # Loose tolerance: bf16 weights + bf16 activations across 3 layers
    # (f32 accumulation / BN / ReLU inside the kernels).
    y_ref = _ref_down_block(x, params)
    jax.block_until_ready(y_ref)
    assert jnp.allclose(y, y_ref, rtol=5e-2, atol=5e-2), \
        float(jnp.max(jnp.abs(y - y_ref)))

    print("KERNEL_OK")
</pallas_src>

<mosaic_0001>
module attributes {stable_mosaic.version = 11 : i64} {
  func.func @_matmul_shift_relu_kernel(%arg0: i32, %arg1: memref<64x128xbf16, #tpu.memory_space<vmem>>, %arg2: memref<128x128xbf16, #tpu.memory_space<vmem>>, %arg3: memref<1x128xf32, #tpu.memory_space<vmem>>, %arg4: memref<64x128xbf16, #tpu.memory_space<vmem>>) attributes {dimension_semantics = [#tpu.dimension_semantics<parallel>], iteration_bounds = array<i64: 2>, scalar_prefetch = 0 : i64, scratch_operands = 0 : i64, tpu.core_type = #tpu.core_type<tc>, window_params = [{transform_indices = @transform_0, window_bounds = array<i64: 64, 128>}, {pipeline_mode = #tpu.pipeline_mode<synchronous>, transform_indices = @transform_1, window_bounds = array<i64: 128, 128>}, {pipeline_mode = #tpu.pipeline_mode<synchronous>, transform_indices = @transform_2, window_bounds = array<i64: 1, 128>}, {transform_indices = @transform_3, window_bounds = array<i64: 64, 128>}]} {
    %c0 = arith.constant 0 : index
    %c0_0 = arith.constant 0 : index
    %0 = vector.load %arg1[%c0, %c0_0] : memref<64x128xbf16, #tpu.memory_space<vmem>>, vector<64x128xbf16>
    %c0_1 = arith.constant 0 : index
    %c0_2 = arith.constant 0 : index
    %1 = vector.load %arg2[%c0_1, %c0_2] : memref<128x128xbf16, #tpu.memory_space<vmem>>, vector<128x128xbf16>
    %cst = arith.constant dense<0.000000e+00> : vector<64x128xf32>
    %2 = tpu.matmul %0, %1, %cst {dimension_numbers = #tpu.dot_dimension_numbers<[1], [0], [0], [1], [0, 0, 1, 1], [], []>} : vector<64x128xbf16>, vector<128x128xbf16>, vector<64x128xf32> -> vector<64x128xf32>
    %c0_3 = arith.constant 0 : index
    %c0_4 = arith.constant 0 : index
    %3 = vector.load %arg3[%c0_3, %c0_4] : memref<1x128xf32, #tpu.memory_space<vmem>>, vector<1x128xf32>
    %4 = vector.broadcast %3 : vector<1x128xf32> to vector<64x128xf32>
    %5 = arith.addf %2, %4 : vector<64x128xf32>
    %cst_5 = arith.constant 0.000000e+00 : f32
    %6 = vector.broadcast %cst_5 : f32 to vector<64x128xf32>
    %7 = arith.maximumf %5, %6 : vector<64x128xf32>
    %8 = arith.truncf %7 : vector<64x128xf32> to vector<64x128xbf16>
    %c0_6 = arith.constant 0 : index
    %c0_7 = arith.constant 0 : index
    %9 = vector.load %arg4[%c0_6, %c0_7] : memref<64x128xbf16, #tpu.memory_space<vmem>>, vector<64x128xbf16>
    tpu.vector_store %arg4[%c0_6, %c0_7], %8 {strides = array<i32>} : memref<64x128xbf16, #tpu.memory_space<vmem>>, vector<64x128xbf16>,
    return
  }
  func.func @transform_0(%arg0: i32) -> (i32, i32) {
    %c0_i32 = arith.constant 0 : i32
    %c0_i32_0 = arith.constant 0 : i32
    return %arg0, %c0_i32 : i32, i32
  }
  func.func @transform_1(%arg0: i32) -> (i32, i32) {
    %c0_i32 = arith.constant 0 : i32
    %c0_i32_0 = arith.constant 0 : i32
    %c0_i32_1 = arith.constant 0 : i32
    return %c0_i32, %c0_i32_0 : i32, i32
  }
  func.func @transform_2(%arg0: i32) -> (i32, i32) {
    %c0_i32 = arith.constant 0 : i32
    %c0_i32_0 = arith.constant 0 : i32
    %c0_i32_1 = arith.constant 0 : i32
    return %c0_i32, %c0_i32_0 : i32, i32
  }
  func.func @transform_3(%arg0: i32) -> (i32, i32) {
    %c0_i32 = arith.constant 0 : i32
    %c0_i32_0 = arith.constant 0 : i32
    return %arg0, %c0_i32 : i32, i32
  }
}

</mosaic_0001>

<llo_original>
// kernel: tpu_custom_call.1
$region0: #{tpu_custom_call.1}
  #allocation0 [shape = 'u32[]', space=smem, size = 0x4, offset = 0x4, fixed_abs, tag = 'smem constant byte address 0x4 - core index']
  #allocation1 [shape = 'u32[144,128]{1,0:T(1,128)}', space=vmem, size = 0x12000, scoped, tag = 'internal scratch']
  %s0 = inlined_call_operand.hbm [shape: bf16[128,128], index: 0, kind: input, shape index: {}]
  %s1 = inlined_call_operand.hbm [shape: bf16[128,128], index: 1, kind: input, shape index: {}]
  %s2 = inlined_call_operand.vmem [shape: f32[1,128], index: 2, kind: input, shape index: {}]
  %s3 = inlined_call_operand.hbm [shape: bf16[128,128], index: 3, kind: output, shape index: {}]
  %s4 = sld [smem:[#allocation0]]
  $region53: #{tpu_custom_call.1} parent=0
    _
  %s6 = ssub.s32 1, %s4
  %s7 = scalar_select 0, %s6, %s4
  $region1: #{tpu_custom_call.1} parent=0
    #allocation2 [shape = 'u8[32768]{0}', space=vmem, size = 0x8000, scoped, tag = 'input window, operand 0']
    #allocation3 [shape = 's32[2]{0}', space=sflag, size = 0x8, scoped, tag = 'scoped memory for tpu_custom_call.1']
    #allocation4 [shape = 's32[2]{0}', space=sflag, size = 0x8, scoped, tag = 'scoped memory for tpu_custom_call.1']
    #allocation5 [shape = 'u8[32768]{0}', space=vmem, size = 0x8000, scoped, tag = 'input window, operand 1, single buffered']
    #allocation6 [shape = 's32[1]{0}', space=sflag, size = 0x4, scoped, tag = 'scoped memory for tpu_custom_call.1']
    #allocation7 [shape = 'u8[32768]{0}', space=vmem, size = 0x8000, scoped, tag = 'output window, operand 0']
    %8 = vsyncpa [#allocation3], 0
    %s9 = scalar_lea.sflag [#allocation3], 1
    %10 = vsyncpa %s9, 0
    %11 = vsyncpa [#allocation6], 0
    %12 = vsyncpa [#allocation4], 0
    %s13 = scalar_lea.sflag [#allocation4], 1
    %14 = vsyncpa %s13, 0
    loop: start=0, step=1, limit=4
    $region2: #{tpu_custom_call.1} parent=1 // loop_pre_header
      _
    $region3: #{tpu_custom_call.1} parent=1 // loop_header
      %s16 = sphi 0, %s20
      %p17 = scmp.ge.s32.totalorder %s16, 4
      %s26 = sphi 0, %s28
      %s29 = sphi 0, %s26
      %s30 = sphi 0, %s29
      %s46 = sphi 0, %s30
      %s50 = sphi 0, %s50
      %s52 = sphi 0, %s50
      %s53 = sphi 0, %s52
      %s67 = sphi 0, %s53
      %s71 = sphi 0, %s71
      %s73 = sphi 0, %s71
      %s74 = sphi 0, %s73
      %s88 = sphi 0, %s74
      %s94 = sphi 0, %s96
      %s97 = sphi 0, %s94
      %s98 = sphi 0, %s97
      %s114 = sphi 0, %s98
    $region4: #{tpu_custom_call.1} parent=1 // loop_header_branch
      %19 = sbr.rel (%p17) target = $region8
    $region5: #{tpu_custom_call.1} parent=1 // loop_body
      %s21 = ssub.s32 %s16, 1
      %s22 = ssub.s32 %s16, 2
      %s23 = sadd.s32 %s16, 1
      %s24 = ssub.s32 %s16, %s23
      %p25 = scmp.eq.s32.totalorder %s24, 0
      %s27 = sadd.s32 %s26, 1
      %s28 = scalar_select %p25, %s26, %s27
      %p31 = pneg %p25
      %p32 = scmp.eq.s32.totalorder %s16, 1
      %p33 = por %p31, %p32
      %p34 = scmp.ne.s32.totalorder %s26, %s29
      %p35 = scmp.eq.s32.totalorder %s16, 0
      %p36 = por %p34, %p35
      %p37 = scmp.ne.s32.totalorder %s26, %s29
      %p38 = scmp.eq.s32.totalorder %s21, 1
      %p39 = por %p37, %p38
      %p40 = scmp.ne.s32.totalorder %s29, %s30
      %p41 = scmp.eq.s32.totalorder %s21, 0
      %p42 = por %p40, %p41
      %p43 = scmp.ne.s32.totalorder %s29, %s30
      %p44 = scmp.eq.s32.totalorder %s22, 1
      %p45 = por %p43, %p44
      %p47 = scmp.ne.s32.totalorder %s30, %s46
      %p48 = scmp.eq.s32.totalorder %s22, 0
      %p49 = por %p47, %p48
      %s51 = sadd.s32 %s50, 1
      %p54 = scmp.eq.s32.totalorder %s16, 1
      %p55 = scmp.ne.s32.totalorder %s50, %s52
      %p56 = scmp.eq.s32.totalorder %s16, 0
      %p57 = por %p55, %p56
      %p58 = scmp.ne.s32.totalorder %s50, %s52
      %p59 = scmp.eq.s32.totalorder %s21, 1
      %p60 = por %p58, %p59
      %p61 = scmp.ne.s32.totalorder %s52, %s53
      %p62 = scmp.eq.s32.totalorder %s21, 0
      %p63 = por %p61, %p62
      %p64 = scmp.ne.s32.totalorder %s52, %s53
      %p65 = scmp.eq.s32.totalorder %s22, 1
      %p66 = por %p64, %p65
      %p68 = scmp.ne.s32.totalorder %s53, %s67
      %p69 = scmp.eq.s32.totalorder %s22, 0
      %p70 = por %p68, %p69
      %s72 = sadd.s32 %s71, 1
      %p75 = scmp.eq.s32.totalorder %s16, 1
      %p76 = scmp.ne.s32.totalorder %s71, %s73
      %p77 = scmp.eq.s32.totalorder %s16, 0
      %p78 = por %p76, %p77
      %p79 = scmp.ne.s32.totalorder %s71, %s73
      %p80 = scmp.eq.s32.totalorder %s21, 1
      %p81 = por %p79, %p80
      %p82 = scmp.ne.s32.totalorder %s73, %s74
      %p83 = scmp.eq.s32.totalorder %s21, 0
      %p84 = por %p82, %p83
      %p85 = scmp.ne.s32.totalorder %s73, %s74
      %p86 = scmp.eq.s32.totalorder %s22, 1
      %p87 = por %p85, %p86
      %p89 = scmp.ne.s32.totalorder %s74, %s88
      %p90 = scmp.eq.s32.totalorder %s22, 0
      %p91 = por %p89, %p90
      %s92 = ssub.s32 %s16, %s23
      %p93 = scmp.eq.s32.totalorder %s92, 0
      %s95 = sadd.s32 %s94, 1
      %s96 = scalar_select %p93, %s94, %s95
      %p99 = pneg %p93
      %p100 = scmp.eq.s32.totalorder %s16, 1
      %p101 = por %p99, %p100
      %p102 = scmp.ne.s32.totalorder %s94, %s97
      %p103 = scmp.eq.s32.totalorder %s16, 0
      %p104 = por %p102, %p103
      %p105 = scmp.ne.s32.totalorder %s94, %s97
      %p106 = scmp.eq.s32.totalorder %s21, 1
      %p107 = por %p105, %p106
      %p108 = scmp.ne.s32.totalorder %s97, %s98
      %p109 = scmp.eq.s32.totalorder %s21, 0
      %p110 = por %p108, %p109
      %p111 = scmp.ne.s32.totalorder %s97, %s98
      %p112 = scmp.eq.s32.totalorder %s22, 1
      %p113 = por %p111, %p112
      %p115 = scmp.ne.s32.totalorder %s98, %s114
      %p116 = scmp.eq.s32.totalorder %s22, 0
      %p117 = por %p115, %p116
      %p118 = scmp.le.s32.totalorder 1, %s16
      %p119 = scmp.lt.s32.totalorder %s16, 3
      %p120 = pnand %p118, %p119
      %p121 = pneg %p120
      // Predicated region
      $region9: #{tpu_custom_call.1} parent=5 // pred_check
        _
      $region10: #{tpu_custom_call.1} parent=5 // pred_check_branch
        %123 = sbr.rel (%p120) target = $region12
      $region11: #{tpu_custom_call.1} parent=5 // pred_region
        %s124 = ssub.s32 %s16, 1
        // Predicated region
        $region13: #{tpu_custom_call.1} parent=11 // pred_check
          %p125 = pneg %p63
        $region14: #{tpu_custom_call.1} parent=11 // pred_check_branch
          %127 = sbr.rel (%p125) target = $region16
        $region15: #{tpu_custom_call.1} parent=11 // pred_region
          %s129 = ssub.s32 1024, 1024
          %130 = vsyncadd [#allocation6], %s129
          %s131 = sshll.u32 [#allocation5], 4
          %s132 = int_to_ptr.vmem [resolvable:$true] %s131
          %137 = dma.hbm_to_vmem [thread:$0]  %s1, 1024, %s132, [#allocation6], 64, 64, 4
        $region16: #{tpu_custom_call.1} parent=11 // pred_fallthru
          _
        // Predicated region
        $region17: #{tpu_custom_call.1} parent=11 // pred_check
          %p138 = pneg %p84
        $region18: #{tpu_custom_call.1} parent=11 // pred_check_branch
          %140 = sbr.rel (%p138) target = $region20
        $region19: #{tpu_custom_call.1} parent=11 // pred_region
          _
        $region20: #{tpu_custom_call.1} parent=11 // pred_fallthru
          _
      $region12: #{tpu_custom_call.1} parent=5 // pred_fallthru
        _
      %p141 = scmp.lt.s32.totalorder %s16, 2
      // Predicated region
      $region21: #{tpu_custom_call.1} parent=5 // pred_check
        %p142 = pneg %p141
      $region22: #{tpu_custom_call.1} parent=5 // pred_check_branch
        %144 = sbr.rel (%p142) target = $region24
      $region23: #{tpu_custom_call.1} parent=5 // pred_region
        // Predicated region
        $region25: #{tpu_custom_call.1} parent=23 // pred_check
          %p145 = pneg %p36
        $region26: #{tpu_custom_call.1} parent=23 // pred_check_branch
          %147 = sbr.rel (%p145) target = $region28
        $region27: #{tpu_custom_call.1} parent=23 // pred_region
          %s148 = sand.u32 %s26, 1
          %s149 = scalar_lea.sflag [#allocation3], %s148
          %s150 = sand.u32 %s26, 1
          %s151 = smul.addr %s150, 32
          %s152 = scalar_lea.vmem [#allocation2], %s151
          %s153 = smul.u32 8, %s16
          %s155 = ssub.s32 512, 512
          %156 = vsyncadd %s149, %s155
          %s157 = smul.addr %s153, 64
          %s158 = scalar_lea.hbm %s0, %s157
          %s159 = sshll.u32 %s152, 4
          %s160 = int_to_ptr.vmem [resolvable:$true] %s159
          %165 = dma.hbm_to_vmem [thread:$0]  %s158, 512, %s160, %s149, 64, 64, 4
        $region28: #{tpu_custom_call.1} parent=23 // pred_fallthru
          _
      $region24: #{tpu_custom_call.1} parent=5 // pred_fallthru
        _
      %p166 = scmp.le.s32.totalorder 1, %s16
      %p167 = scmp.lt.s32.totalorder %s16, 3
      %p168 = pnand %p166, %p167
      %p169 = pneg %p168
      // Predicated region
      $region29: #{tpu_custom_call.1} parent=5 // pred_check
        _
      $region30: #{tpu_custom_call.1} parent=5 // pred_check_branch
        %171 = sbr.rel (%p168) target = $region32
      $region31: #{tpu_custom_call.1} parent=5 // pred_region
        %s172 = ssub.s32 %s16, 1
        %s173 = sand.u32 %s29, 1
        %s174 = scalar_lea.sflag [#allocation3], %s173
        %s175 = sand.u32 %s29, 1
        %s176 = smul.addr %s175, 32
        %s177 = scalar_lea.vmem [#allocation2], %s176
        // Predicated region
        $region33: #{tpu_custom_call.1} parent=31 // pred_check
          %p178 = pneg %p42
        $region34: #{tpu_custom_call.1} parent=31 // pred_check_branch
          %180 = sbr.rel (%p178) target = $region36
        $region35: #{tpu_custom_call.1} parent=31 // pred_region
          %181 = dma.done %s174, 512
        $region36: #{tpu_custom_call.1} parent=31 // pred_fallthru
          _
        // Predicated region
        $region37: #{tpu_custom_call.1} parent=31 // pred_check
          %p182 = pneg %p63
        $region38: #{tpu_custom_call.1} parent=31 // pred_check_branch
          %184 = sbr.rel (%p182) target = $region40
        $region39: #{tpu_custom_call.1} parent=31 // pred_region
          %185 = dma.done [#allocation6], 1024
        $region40: #{tpu_custom_call.1} parent=31 // pred_fallthru
          _
        %s186 = sand.u32 %s29, 1
        %s187 = scalar_lea.sflag [#allocation3], %s186
        %s188 = sand.u32 %s29, 1
        %s189 = smul.addr %s188, 32
        %s190 = scalar_lea.vmem [#allocation2], %s189
        %p191 = pneg %p42
        %p192 = pneg %p39
        %p193 = pneg %p63
        %p194 = pneg %p60
        %p195 = pneg %p84
        %p196 = pneg %p81
        %p197 = pneg %p110
        %p198 = pneg %p107
        %s199 = sand.u32 %s97, 1
        %s200 = scalar_lea.sflag [#allocation4], %s199
        %s201 = sand.u32 %s97, 1
        %s202 = smul.addr %s201, 32
        %s203 = scalar_lea.vmem [#allocation7], %s202
        %s204 = smul.u32 8, %s21
        %s205 = smul.u32 8, %s21
        %v207 = vld [vmem:[%s177] sm:$0xf]
        %v208 = vld [vmem:[%s177 + $0x4] sm:$0xf]
        %v209 = vld [vmem:[%s177 + $0x8] sm:$0xf]
        %v210 = vld [vmem:[%s177 + $0xc] sm:$0xf]
        %v211 = vld [vmem:[%s177 + $0x10] sm:$0xf]
        %v212 = vld [vmem:[%s177 + $0x14] sm:$0xf]
        %v213 = vld [vmem:[%s177 + $0x18] sm:$0xf]
        %v214 = vld [vmem:[%s177 + $0x1c] sm:$0xf]
        %v215 = vld [vmem:[#allocation5] sm:$0xf]
        %v216 = vld [vmem:[#allocation5 + $0x4] sm:$0xf]
        %v217 = vld [vmem:[#allocation5 + $0x8] sm:$0xf]
        %v218 = vld [vmem:[#allocation5 + $0xc] sm:$0xf]
        %v219 = vld [vmem:[#allocation5 + $0x10] sm:$0xf]
        %v220 = vld [vmem:[#allocation5 + $0x14] sm:$0xf]
        %v221 = vld [vmem:[#allocation5 + $0x18] sm:$0xf]
        %v222 = vld [vmem:[#allocation5 + $0x1c] sm:$0xf]
        %v223 = vld [vmem:[#allocation5 + $0x20] sm:$0xf]
        %v224 = vld [vmem:[#allocation5 + $0x24] sm:$0xf]
        %v225 = vld [vmem:[#allocation5 + $0x28] sm:$0xf]
        %v226 = vld [vmem:[#allocation5 + $0x2c] sm:$0xf]
        %v227 = vld [vmem:[#allocation5 + $0x30] sm:$0xf]
        %v228 = vld [vmem:[#allocation5 + $0x34] sm:$0xf]
        %v229 = vld [vmem:[#allocation5 + $0x38] sm:$0xf]
        %v230 = vld [vmem:[#allocation5 + $0x3c] sm:$0xf]
        %v231 = vld [vmem:[%s2] sm:$0x1]
        %v233 = vlaneseq
        %v234 = vshrl.u32 %v233, 7
        %v235 = vsub.s32 0, %v234
        %v236 = vrot.slane %v231, %v235
        %v246 = vunpack.c.l.b16 %v207
        %v247 = vunpack.c.l.b16 %v208
        %v248 = vunpack.c.l.b16 %v209
        %v249 = vunpack.c.l.b16 %v210
        %v250 = vunpack.c.l.b16 %v211
        %v251 = vunpack.c.l.b16 %v212
        %v252 = vunpack.c.l.b16 %v213
        %v253 = vunpack.c.l.b16 %v214
        %v254 = vpack.c.b16 %v247, %v246
        %v255 = vpack.c.b16 %v249, %v248
        %v256 = vpack.c.b16 %v251, %v250
        %v257 = vpack.c.b16 %v253, %v252
        %v278 = vunpack.c.l.b16 %v215
        %v279 = vunpack.c.l.b16 %v216
        %v280 = vunpack.c.l.b16 %v217
        %v281 = vunpack.c.l.b16 %v218
        %v282 = vunpack.c.l.b16 %v219
        %v283 = vunpack.c.l.b16 %v220
        %v284 = vunpack.c.l.b16 %v221
        %v285 = vunpack.c.l.b16 %v222
        %v286 = vunpack.c.l.b16 %v223
        %v287 = vunpack.c.l.b16 %v224
        %v288 = vunpack.c.l.b16 %v225
        %v289 = vunpack.c.l.b16 %v226
        %v290 = vunpack.c.l.b16 %v227
        %v291 = vunpack.c.l.b16 %v228
        %v292 = vunpack.c.l.b16 %v229
        %v293 = vunpack.c.l.b16 %v230
        %v294 = vpack.c.b16 %v279, %v278
        %v295 = vpack.c.b16 %v281, %v280
        %v296 = vpack.c.b16 %v283, %v282
        %v297 = vpack.c.b16 %v285, %v284
        %v298 = vpack.c.b16 %v287, %v286
        %v299 = vpack.c.b16 %v289, %v288
        %v300 = vpack.c.b16 %v291, %v290
        %v301 = vpack.c.b16 %v293, %v292
        %310 = vmatprep.subr.bf16.mxu0 0
        %311 = vmatpush1.bf16.msra.mxu0 %v301
        %312 = vmatprep.subr.bf16.mxu0 0
        %313 = vmatpush1.bf16.msra.mxu0 %v300
        %314 = vmatprep.subr.bf16.mxu0 0
        %315 = vmatpush1.bf16.msra.mxu0 %v299
        %316 = vmatprep.subr.bf16.mxu0 0
        %317 = vmatpush1.bf16.msra.mxu0 %v298
        %318 = vmatprep.subr.bf16.mxu0 0
        %319 = vmatpush1.bf16.msra.mxu0 %v297
        %320 = vmatprep.subr.bf16.mxu0 0
        %321 = vmatpush1.bf16.msra.mxu0 %v296
        %322 = vmatprep.subr.bf16.mxu0 0
        %323 = vmatpush1.bf16.msra.mxu0 %v295
        %324 = vmatprep.subr.bf16.mxu0 0
        %325 = vmatpush1.bf16.msra.mxu0 %v294
        %326 = vmatprep.subr.bf16.mxu0 0
        %327 = vmatpush2.bf16.msra.mxu0 0
        %328 = vmatprep.subr.bf16.mxu0 0
        %329 = vmatpush2.bf16.msra.mxu0 0
        %330 = vmatprep.subr.bf16.mxu0 0
        %331 = vmatpush2.bf16.msra.mxu0 0
        %332 = vmatprep.subr.bf16.mxu0 0
        %333 = vmatpush2.bf16.msra.mxu0 0
        %334 = vmatprep.subr.bf16.mxu0 0
        %335 = vmatpush2.bf16.msra.mxu0 0
        %336 = vmatprep.subr.bf16.mxu0 0
        %337 = vmatpush2.bf16.msra.mxu0 0
        %338 = vmatprep.subr.bf16.mxu0 0
        %339 = vmatpush2.bf16.msra.mxu0 0
        %340 = vmatprep.subr.bf16.mxu0 0
        %341 = vmatpush2.bf16.msra.mxu0 0
        %342 = vmatprep.mubr.bf16.mxu0 0
        %343 = vmatmul.mubr.bf16.gmra.mxu0 %v254
        %v344 = vpop.f32.mrf.mxu0
        %v345 = vadd.f32 %v236, %v344
        %v346 = vpop.f32.mrf.mxu0
        %v347 = vpop.f32.mrf.mxu0
        %v348 = vadd.f32 %v236, %v347
        %v349 = vpop.f32.mrf.mxu0
        %350 = vmatprep.mubr.bf16.mxu0 0
        %351 = vmatmul.mubr.bf16.gmra.mxu0 %v255
        %v352 = vpop.f32.mrf.mxu0
        %v353 = vadd.f32 %v236, %v352
        %v354 = vpop.f32.mrf.mxu0
        %v355 = vpop.f32.mrf.mxu0
        %v356 = vadd.f32 %v236, %v355
        %v357 = vpop.f32.mrf.mxu0
        %358 = vmatprep.mubr.bf16.mxu0 0
        %359 = vmatmul.mubr.bf16.gmra.mxu0 %v256
        %v360 = vpop.f32.mrf.mxu0
        %v361 = vadd.f32 %v236, %v360
        %v362 = vpop.f32.mrf.mxu0
        %v363 = vpop.f32.mrf.mxu0
        %v364 = vadd.f32 %v236, %v363
        %v365 = vpop.f32.mrf.mxu0
        %366 = vmatprep.mubr.bf16.mxu0 0
        %367 = vmatmul.mubr.bf16.gmra.mxu0 %v257
        %v368 = vpop.f32.mrf.mxu0
        %v369 = vadd.f32 %v236, %v368
        %v370 = vpop.f32.mrf.mxu0
        %v371 = vpop.f32.mrf.mxu0
        %v372 = vadd.f32 %v236, %v371
        %v373 = vpop.f32.mrf.mxu0
        %374 = vdwg.mxu0
        %v375 = vmax.f32 %v345, 0.0
        %v376 = vmax.f32 %v348, 0.0
        %v377 = vmax.f32 %v353, 0.0
        %v378 = vmax.f32 %v356, 0.0
        %v379 = vmax.f32 %v361, 0.0
        %v380 = vmax.f32 %v364, 0.0
        %v381 = vmax.f32 %v369, 0.0
        %v382 = vmax.f32 %v372, 0.0
        %v383 = vpack.c.bf16 %v376, %v375
        %v384 = vpack.c.bf16 %v378, %v377
        %v385 = vpack.c.bf16 %v380, %v379
        %v386 = vpack.c.bf16 %v382, %v381
        %v391 = vunpack.c.l.b16 %v383
        %v392 = vunpack.c.h.b16 %v383
        %v393 = vunpack.c.l.b16 %v384
        %v394 = vunpack.c.h.b16 %v384
        %v395 = vunpack.c.l.b16 %v385
        %v396 = vunpack.c.h.b16 %v385
        %v397 = vunpack.c.l.b16 %v386
        %v398 = vunpack.c.h.b16 %v386
        %v399 = vpack.c.b16 %v391, %v391
        %v400 = vpack.c.b16 %v392, %v392
        %v401 = vpack.c.b16 %v393, %v393
        %v402 = vpack.c.b16 %v394, %v394
        %v403 = vpack.c.b16 %v395, %v395
        %v404 = vpack.c.b16 %v396, %v396
        %v405 = vpack.c.b16 %v397, %v397
        %v406 = vpack.c.b16 %v398, %v398
        %415 = vst [vmem:[%s203] sm:$0xf] %v399
        %416 = vst [vmem:[%s203 + $0x4] sm:$0xf] %v400
        %417 = vst [vmem:[%s203 + $0x8] sm:$0xf] %v401
        %418 = vst [vmem:[%s203 + $0xc] sm:$0xf] %v402
        %419 = vst [vmem:[%s203 + $0x10] sm:$0xf] %v403
        %420 = vst [vmem:[%s203 + $0x14] sm:$0xf] %v404
        %421 = vst [vmem:[%s203 + $0x18] sm:$0xf] %v405
        %422 = vst [vmem:[%s203 + $0x1c] sm:$0xf] %v406
        %s423 = sand.u32 %s97, 1
        %s424 = scalar_lea.sflag [#allocation4], %s423
        %s425 = sand.u32 %s97, 1
        %s426 = smul.addr %s425, 32
        %s427 = scalar_lea.vmem [#allocation7], %s426
        // Predicated region
        $region41: #{tpu_custom_call.1} parent=31 // pred_check
          %p428 = pneg %p107
        $region42: #{tpu_custom_call.1} parent=31 // pred_check_branch
          %430 = sbr.rel (%p428) target = $region44
        $region43: #{tpu_custom_call.1} parent=31 // pred_region
          %s431 = smul.u32 8, %s21
          %s433 = ssub.s32 512, 512
          %434 = vsyncadd %s424, %s433
          %s435 = smul.addr %s431, 64
          %s436 = scalar_lea.hbm %s3, %s435
          %s437 = sshll.u32 %s427, 4
          %s438 = int_to_ptr.vmem [resolvable:$true] %s437
          %443 = dma.vmem_to_hbm [thread:$0]  %s438, 512, %s436, %s424, 64, 64, 4
        $region44: #{tpu_custom_call.1} parent=31 // pred_fallthru
          _
      $region32: #{tpu_custom_call.1} parent=5 // pred_fallthru
        _
      %p444 = scmp.le.s32.totalorder 2, %s16
      // Predicated region
      $region45: #{tpu_custom_call.1} parent=5 // pred_check
        %p445 = pneg %p444
      $region46: #{tpu_custom_call.1} parent=5 // pred_check_branch
        %447 = sbr.rel (%p445) target = $region48
      $region47: #{tpu_custom_call.1} parent=5 // pred_region
        %s448 = ssub.s32 %s16, 2
        // Predicated region
        $region49: #{tpu_custom_call.1} parent=47 // pred_check
          %p449 = pneg %p113
        $region50: #{tpu_custom_call.1} parent=47 // pred_check_branch
          %451 = sbr.rel (%p449) target = $region52
        $region51: #{tpu_custom_call.1} parent=47 // pred_region
          %s452 = sand.u32 %s98, 1
          %s453 = scalar_lea.sflag [#allocation4], %s452
          %s454 = sand.u32 %s98, 1
          %s455 = smul.addr %s454, 32
          %s456 = scalar_lea.vmem [#allocation7], %s455
          %457 = dma.done %s453, 512
        $region52: #{tpu_custom_call.1} parent=47 // pred_fallthru
          _
      $region48: #{tpu_custom_call.1} parent=5 // pred_fallthru
        _
    $region6: #{tpu_custom_call.1} parent=1 // loop_footer
      %s20 = sadd.s32 1, %s16
    $region7: #{tpu_custom_call.1} parent=1 // loop_footer_branch
      %15 = sbr.rel target = $region3
    $region8: #{tpu_custom_call.1} parent=1 // loop_exit
      _
    %458 = vsyncpa [#allocation3], 1
    %s459 = scalar_lea.sflag [#allocation3], 1
    %460 = vsyncpa %s459, 1
    %461 = vsyncpa [#allocation6], 1
    %462 = vsyncpa [#allocation4], 1
    %s463 = scalar_lea.sflag [#allocation4], 1
    %464 = vsyncpa %s463, 1

</llo_original>
